<compile_context>
chip_gen: v5e
topology: v5e:2x2
jax: 0.10.0
libtpu: 0.0.40
codegen_flags: <defaults>
</compile_context>

<pallas_src>
import jax
import jax.numpy as jnp
from jax.experimental import pallas as pl
from jax.experimental.pallas import tpu as pltpu


def _round_up(n, m):
    return ((n + m - 1) // m) * m


def _cdiv(a, b):
    return -(-a // b)


def pg_mlp_kernel(x_ref, w1_ref, b1_ref, w2_ref, b2_ref, o_ref):
    # Cast inside the kernel (mirrors x.float()); rides the VPU slot.
    x = x_ref[...].astype(jnp.float32)
    # Hidden layer: x @ W1 + b1, ReLU  (MXU matmul + VPU elementwise).
    h = jnp.dot(x, w1_ref[...], preferred_element_type=jnp.float32)
    h = jnp.maximum(h + b1_ref[...], 0.0)        # b1 is [1, Hp], broadcasts
    # Output layer: h @ W2 + b2 (narrow [TB, A] result; written as-is).
    out = jnp.dot(h, w2_ref[...], preferred_element_type=jnp.float32)
    o_ref[...] = (out + b2_ref[...]).astype(o_ref.dtype)


def prepare_params(w1, b1, w2, b2):
    """One-time padding/casting of the parameters (call OUTSIDE the hot path).

    w1: [D, H], b1: [H] or [1, H], w2: [H, A], b2: [A] or [1, A].
    Pads the hidden dim H to a multiple of 128 with zeros; padded hidden
    channels yield relu(0) = 0 and the matching zero rows of W2 contribute
    nothing, so the math is unchanged. The action dim A is left unpadded
    (narrow, lane-masked output store; HBM-traffic win for tiny A).
    """
    D, H = w1.shape
    A = w2.shape[1]
    Hp = _round_up(H, 128)
    b1 = jnp.asarray(b1, jnp.float32).reshape(1, H)
    b2 = jnp.asarray(b2, jnp.float32).reshape(1, A)
    w1p = jnp.zeros((D, Hp), jnp.float32).at[:, :H].set(jnp.asarray(w1, jnp.float32))
    b1p = jnp.zeros((1, Hp), jnp.float32).at[:, :H].set(b1)
    w2p = jnp.zeros((Hp, A), jnp.float32).at[:H, :].set(jnp.asarray(w2, jnp.float32))
    return w1p, b1p, w2p, b2


def pg_nn_forward(x, params, *, block_b=1024):
    """Pallas-backed PG_nn forward.

    x: [B, D] (any float/int dtype; cast to f32 in-kernel) -> [B, A] float32.
    params: output of prepare_params().
    """
    w1p, b1p, w2p, b2p = params
    B, D = x.shape
    Hp = w1p.shape[1]
    A = w2p.shape[1]

    # Batch tile selection (all static Python ints; shapes are static under jit).
    if B <= block_b:
        TB = B                      # full-extent block: always layout-legal
        n_tiles = 1
    else:
        TB = _round_up(block_b, 8)  # sublane-aligned when actually tiling
        n_tiles = _cdiv(B, TB)
        # v7x: "parallel" batch axis shards across 2 TensorCores -> prefer an
        # even tile count for load balance (no effect on single-TC v5e/v6e).
        if n_tiles > 1 and n_tiles % 2 == 1:
            TB = _round_up(_cdiv(B, n_tiles + 1), 8)
            n_tiles = _cdiv(B, TB)

    out = pl.pallas_call(
        pg_mlp_kernel,
        out_shape=jax.ShapeDtypeStruct((B, A), jnp.float32),
        grid=(n_tiles,),
        in_specs=[
            # x: one batch tile per grid step (auto-pipelined HBM->VMEM);
            # the ragged last tile is edge-masked by Pallas.
            pl.BlockSpec((TB, D), lambda i: (i, 0)),
            # Weights/biases: constant index_map -> VMEM-resident across steps.
            pl.BlockSpec((D, Hp), lambda i: (0, 0)),
            pl.BlockSpec((1, Hp), lambda i: (0, 0)),
            pl.BlockSpec((Hp, A), lambda i: (0, 0)),
            pl.BlockSpec((1, A), lambda i: (0, 0)),
        ],
        # Narrow, exact-width output: nothing to slice afterwards.
        out_specs=pl.BlockSpec((TB, A), lambda i: (i, 0)),
        compiler_params=pltpu.CompilerParams(
            dimension_semantics=("parallel",),
        ),
    )(x, w1p, b1p, w2p, b2p)

    return out


def init_params(key, input_dim, n_actions, hidden=64):
    """Deterministic PyTorch-style (uniform +-1/sqrt(fan_in)) Linear init."""
    k1, k2, k3, k4 = jax.random.split(key, 4)
    bound1 = 1.0 / jnp.sqrt(input_dim)
    bound2 = 1.0 / jnp.sqrt(hidden)
    # Stored transposed relative to PyTorch ([in, out] instead of [out, in]).
    w1 = jax.random.uniform(k1, (input_dim, hidden), jnp.float32, -bound1, bound1)
    b1 = jax.random.uniform(k2, (hidden,), jnp.float32, -bound1, bound1)
    w2 = jax.random.uniform(k3, (hidden, n_actions), jnp.float32, -bound2, bound2)
    b2 = jax.random.uniform(k4, (n_actions,), jnp.float32, -bound2, bound2)
    return w1, b1, w2, b2


def _reference(x, w1, b1, w2, b2):
    xf = x.astype(jnp.float32)
    return jnp.maximum(xf @ w1 + b1[None, :], 0.0) @ w2 + b2[None, :]


if __name__ == "__main__":
    key = jax.random.PRNGKey(0)
    k_param, k_x1, k_x2 = jax.random.split(key, 3)

    # Small PG-style shapes: observation dim 4 (e.g. CartPole), 2 actions.
    input_dim, n_actions = 4, 2
    w1, b1, w2, b2 = init_params(k_param, input_dim, n_actions)
    params = prepare_params(w1, b1, w2, b2)  # one-time, outside the hot path

    # Case 1: tiny per-step batch (single full-extent tile).
    batch = 8
    x = jax.random.normal(k_x1, (batch, input_dim), jnp.float32)
    out = jax.block_until_ready(pg_nn_forward(x, params))
    ref = _reference(x, w1, b1, w2, b2)
    assert out.shape == (batch, n_actions)
    assert jnp.allclose(out, ref, atol=1e-5, rtol=1e-5), "mismatch (small batch)"

    # Case 2: multi-tile with a ragged last block (27 rows, TB=8 -> 4 tiles,
    # last tile only 3 valid rows) -> exercises edge masking + even tile count.
    batch2 = 27
    x2 = jax.random.normal(k_x2, (batch2, input_dim), jnp.float32)
    out2 = jax.block_until_ready(pg_nn_forward(x2, params, block_b=8))
    ref2 = _reference(x2, w1, b1, w2, b2)
    assert out2.shape == (batch2, n_actions)
    assert jnp.allclose(out2, ref2, atol=1e-5, rtol=1e-5), "mismatch (ragged batch)"

    # Case 3: non-f32 observations exercise the in-kernel x.float() cast.
    x3 = x.astype(jnp.bfloat16)
    out3 = jax.block_until_ready(pg_nn_forward(x3, params))
    ref3 = _reference(x3, w1, b1, w2, b2)
    assert jnp.allclose(out3, ref3, atol=1e-5, rtol=1e-5), "mismatch (bf16 input)"

    print("KERNEL_OK")
</pallas_src>

<mosaic_0001>
module attributes {stable_mosaic.version = 11 : i64} {
  func.func @pg_mlp_kernel(%arg0: i32, %arg1: memref<8x4xf32, #tpu.memory_space<vmem>>, %arg2: memref<4x128xf32, #tpu.memory_space<vmem>>, %arg3: memref<1x128xf32, #tpu.memory_space<vmem>>, %arg4: memref<128x2xf32, #tpu.memory_space<vmem>>, %arg5: memref<1x2xf32, #tpu.memory_space<vmem>>, %arg6: memref<8x2xf32, #tpu.memory_space<vmem>>) attributes {dimension_semantics = [#tpu.dimension_semantics<parallel>], iteration_bounds = array<i64: 1>, scalar_prefetch = 0 : i64, scratch_operands = 0 : i64, tpu.core_type = #tpu.core_type<tc>, window_params = [{transform_indices = @transform_0, window_bounds = array<i64: 8, 4>}, {pipeline_mode = #tpu.pipeline_mode<synchronous>, transform_indices = @transform_1, window_bounds = array<i64: 4, 128>}, {pipeline_mode = #tpu.pipeline_mode<synchronous>, transform_indices = @transform_2, window_bounds = array<i64: 1, 128>}, {pipeline_mode = #tpu.pipeline_mode<synchronous>, transform_indices = @transform_3, window_bounds = array<i64: 128, 2>}, {pipeline_mode = #tpu.pipeline_mode<synchronous>, transform_indices = @transform_4, window_bounds = array<i64: 1, 2>}, {transform_indices = @transform_5, window_bounds = array<i64: 8, 2>}]} {
    %c0 = arith.constant 0 : index
    %c0_0 = arith.constant 0 : index
    %0 = vector.load %arg1[%c0, %c0_0] : memref<8x4xf32, #tpu.memory_space<vmem>>, vector<8x4xf32>
    %c0_1 = arith.constant 0 : index
    %c0_2 = arith.constant 0 : index
    %1 = vector.load %arg2[%c0_1, %c0_2] : memref<4x128xf32, #tpu.memory_space<vmem>>, vector<4x128xf32>
    %cst = arith.constant dense<0.000000e+00> : vector<8x128xf32>
    %2 = tpu.matmul %0, %1, %cst {dimension_numbers = #tpu.dot_dimension_numbers<[1], [0], [0], [1], [0, 0, 1, 1], [], []>} : vector<8x4xf32>, vector<4x128xf32>, vector<8x128xf32> -> vector<8x128xf32>
    %c0_3 = arith.constant 0 : index
    %c0_4 = arith.constant 0 : index
    %3 = vector.load %arg3[%c0_3, %c0_4] : memref<1x128xf32, #tpu.memory_space<vmem>>, vector<1x128xf32>
    %4 = vector.broadcast %3 : vector<1x128xf32> to vector<8x128xf32>
    %5 = arith.addf %2, %4 : vector<8x128xf32>
    %cst_5 = arith.constant 0.000000e+00 : f32
    %6 = vector.broadcast %cst_5 : f32 to vector<8x128xf32>
    %7 = arith.maximumf %5, %6 : vector<8x128xf32>
    %c0_6 = arith.constant 0 : index
    %c0_7 = arith.constant 0 : index
    %8 = vector.load %arg4[%c0_6, %c0_7] : memref<128x2xf32, #tpu.memory_space<vmem>>, vector<128x2xf32>
    %cst_8 = arith.constant dense<0.000000e+00> : vector<8x2xf32>
    %9 = tpu.matmul %7, %8, %cst_8 {dimension_numbers = #tpu.dot_dimension_numbers<[1], [0], [0], [1], [0, 0, 1, 1], [], []>} : vector<8x128xf32>, vector<128x2xf32>, vector<8x2xf32> -> vector<8x2xf32>
    %c0_9 = arith.constant 0 : index
    %c0_10 = arith.constant 0 : index
    %10 = vector.load %arg5[%c0_9, %c0_10] : memref<1x2xf32, #tpu.memory_space<vmem>>, vector<1x2xf32>
    %11 = vector.broadcast %10 : vector<1x2xf32> to vector<8x2xf32>
    %12 = arith.addf %9, %11 : vector<8x2xf32>
    %c0_11 = arith.constant 0 : index
    %c0_12 = arith.constant 0 : index
    %13 = vector.load %arg6[%c0_11, %c0_12] : memref<8x2xf32, #tpu.memory_space<vmem>>, vector<8x2xf32>
    tpu.vector_store %arg6[%c0_11, %c0_12], %12 {strides = array<i32>} : memref<8x2xf32, #tpu.memory_space<vmem>>, vector<8x2xf32>,
    return
  }
  func.func @transform_0(%arg0: i32) -> (i32, i32) {
    %c0_i32 = arith.constant 0 : i32
    %c0_i32_0 = arith.constant 0 : i32
    return %arg0, %c0_i32 : i32, i32
  }
  func.func @transform_1(%arg0: i32) -> (i32, i32) {
    %c0_i32 = arith.constant 0 : i32
    %c0_i32_0 = arith.constant 0 : i32
    %c0_i32_1 = arith.constant 0 : i32
    return %c0_i32, %c0_i32_0 : i32, i32
  }
  func.func @transform_2(%arg0: i32) -> (i32, i32) {
    %c0_i32 = arith.constant 0 : i32
    %c0_i32_0 = arith.constant 0 : i32
    %c0_i32_1 = arith.constant 0 : i32
    return %c0_i32, %c0_i32_0 : i32, i32
  }
  func.func @transform_3(%arg0: i32) -> (i32, i32) {
    %c0_i32 = arith.constant 0 : i32
    %c0_i32_0 = arith.constant 0 : i32
    %c0_i32_1 = arith.constant 0 : i32
    return %c0_i32, %c0_i32_0 : i32, i32
  }
  func.func @transform_4(%arg0: i32) -> (i32, i32) {
    %c0_i32 = arith.constant 0 : i32
    %c0_i32_0 = arith.constant 0 : i32
    %c0_i32_1 = arith.constant 0 : i32
    return %c0_i32, %c0_i32_0 : i32, i32
  }
  func.func @transform_5(%arg0: i32) -> (i32, i32) {
    %c0_i32 = arith.constant 0 : i32
    %c0_i32_0 = arith.constant 0 : i32
    return %arg0, %c0_i32 : i32, i32
  }
}

</mosaic_0001>

<llo_original>
// kernel: tpu_custom_call.1
$region0: #{tpu_custom_call.1}
  #allocation0 [shape = 'u32[]', space=smem, size = 0x4, offset = 0x4, fixed_abs, tag = 'smem constant byte address 0x4 - core index']
  #allocation1 [shape = 'u32[72,128]{1,0:T(1,128)}', space=vmem, size = 0x9000, scoped, tag = 'internal scratch']
  %s0 = inlined_call_operand.vmem [shape: f32[8,4], index: 0, kind: input, shape index: {}]
  %s1 = inlined_call_operand.vmem [shape: f32[4,128], index: 1, kind: input, shape index: {}]
  %s2 = inlined_call_operand.vmem [shape: f32[1,128], index: 2, kind: input, shape index: {}]
  %s3 = inlined_call_operand.vmem [shape: f32[128,2], index: 3, kind: input, shape index: {}]
  %s4 = inlined_call_operand.vmem [shape: f32[1,2], index: 4, kind: input, shape index: {}]
  %s5 = inlined_call_operand.vmem [shape: f32[8,2], index: 5, kind: output, shape index: {}]
  %s6 = sld [smem:[#allocation0]]
  $region30: #{tpu_custom_call.1} parent=0
    _
  %s8 = ssub.s32 1, %s6
  %s9 = scalar_select 0, %s8, %s6
  // Predicated region
  $region2: #{tpu_custom_call.1} parent=0 // pred_check
    _
  $region3: #{tpu_custom_call.1} parent=0 // pred_check_branch
    %11 = sbr.rel (0) target = $region5
  $region4: #{tpu_custom_call.1} parent=0 // pred_region
    _
  $region5: #{tpu_custom_call.1} parent=0 // pred_fallthru
    _
  // Predicated region
  $region6: #{tpu_custom_call.1} parent=0 // pred_check
    _
  $region7: #{tpu_custom_call.1} parent=0 // pred_check_branch
    %13 = sbr.rel (0) target = $region9
  $region8: #{tpu_custom_call.1} parent=0 // pred_region
    _
  $region9: #{tpu_custom_call.1} parent=0 // pred_fallthru
    _
  // Predicated region
  $region10: #{tpu_custom_call.1} parent=0 // pred_check
    _
  $region11: #{tpu_custom_call.1} parent=0 // pred_check_branch
    %15 = sbr.rel (0) target = $region13
  $region12: #{tpu_custom_call.1} parent=0 // pred_region
    _
  $region13: #{tpu_custom_call.1} parent=0 // pred_fallthru
    _
  // Predicated region
  $region14: #{tpu_custom_call.1} parent=0 // pred_check
    _
  $region15: #{tpu_custom_call.1} parent=0 // pred_check_branch
    %17 = sbr.rel (0) target = $region17
  $region16: #{tpu_custom_call.1} parent=0 // pred_region
    _
  $region17: #{tpu_custom_call.1} parent=0 // pred_fallthru
    _
  // Predicated region
  $region18: #{tpu_custom_call.1} parent=0 // pred_check
    _
  $region19: #{tpu_custom_call.1} parent=0 // pred_check_branch
    %19 = sbr.rel (0) target = $region21
  $region20: #{tpu_custom_call.1} parent=0 // pred_region
    _
  $region21: #{tpu_custom_call.1} parent=0 // pred_fallthru
    _
  %v20 = vld [vmem:[%s0] sm:$0xff]
  %v21 = vld [vmem:[%s1] sm:$0xf]
  %v22 = vld [vmem:[%s2] sm:$0x1]
  %v24 = vperm.slane %v22, 0
  %vm26 = vcmask 31744
  %v28 = vsel %vm26, %v20, 0
  %vm30 = vcmask 1043456
  %v32 = vsel %vm30, %v21, 0
  %34 = vmatpush.msra.mxu0 0.0
  %35 = vmatpush.msra.mxu0 0.0
  %36 = vmatpush.msra.mxu0 0.0
  %37 = vmatpush.msra.mxu0 0.0
  %38 = vmatpush.msra.mxu0 0.0
  %39 = vmatpush.msra.mxu0 0.0
  %40 = vmatpush.msra.mxu0 0.0
  %41 = vmatpush.msra.mxu0 0.0
  %42 = vmatpush.msra.mxu0 0.0
  %43 = vmatpush.msra.mxu0 0.0
  %44 = vmatpush.msra.mxu0 0.0
  %45 = vmatpush.msra.mxu0 0.0
  %46 = vmatpush.msra.mxu0 0.0
  %47 = vmatpush.msra.mxu0 0.0
  %48 = vmatpush.msra.mxu0 0.0
  %49 = vmatpush.msra.mxu0 %v32
  %50 = vmatmul.f32.gmra.mxu0 %v28
  %v51 = vpop.f32.mrf.mxu0
  %v52 = vadd.f32 %v24, %v51
  %53 = vdwg.mxu0
  %v54 = vmax.f32 %v52, 0.0
  %v55 = vld [vmem:[%s3] sm:$0xff]
  %v56 = vld [vmem:[%s3 + $0x8] sm:$0xff]
  %v57 = vld [vmem:[%s3 + $0x10] sm:$0xff]
  %v58 = vld [vmem:[%s3 + $0x18] sm:$0xff]
  %v59 = vld [vmem:[%s3 + $0x20] sm:$0xff]
  %v60 = vld [vmem:[%s3 + $0x28] sm:$0xff]
  %v61 = vld [vmem:[%s3 + $0x30] sm:$0xff]
  %v62 = vld [vmem:[%s3 + $0x38] sm:$0xff]
  %v63 = vld [vmem:[%s3 + $0x40] sm:$0xff]
  %v64 = vld [vmem:[%s3 + $0x48] sm:$0xff]
  %v65 = vld [vmem:[%s3 + $0x50] sm:$0xff]
  %v66 = vld [vmem:[%s3 + $0x58] sm:$0xff]
  %v67 = vld [vmem:[%s3 + $0x60] sm:$0xff]
  %v68 = vld [vmem:[%s3 + $0x68] sm:$0xff]
  %v69 = vld [vmem:[%s3 + $0x70] sm:$0xff]
  %v70 = vld [vmem:[%s3 + $0x78] sm:$0xff]
  %v71 = vld [vmem:[%s4] sm:$0x1]
  %v73 = vperm.slane %v71, 0
  %75 = vmatpush.msra.mxu0 %v70
  %76 = vmatpush.msra.mxu0 %v69
  %77 = vmatpush.msra.mxu0 %v68
  %78 = vmatpush.msra.mxu0 %v67
  %79 = vmatpush.msra.mxu0 %v66
  %80 = vmatpush.msra.mxu0 %v65
  %81 = vmatpush.msra.mxu0 %v64
  %82 = vmatpush.msra.mxu0 %v63
  %83 = vmatpush.msra.mxu0 %v62
  %84 = vmatpush.msra.mxu0 %v61
  %85 = vmatpush.msra.mxu0 %v60
  %86 = vmatpush.msra.mxu0 %v59
  %87 = vmatpush.msra.mxu0 %v58
  %88 = vmatpush.msra.mxu0 %v57
  %89 = vmatpush.msra.mxu0 %v56
  %90 = vmatpush.msra.mxu0 %v55
  %91 = vmatmul.f32.gmra.mxu0 %v54
  %v92 = vpop.f32.mrf.mxu0
  %v93 = vadd.f32 %v73, %v92
  %94 = vdwg.mxu0
  %vm95 = vcmask 15360
  %96 = vst.msk [vmem:[%s5] sm:$0xff] %vm95, %v93
  // Predicated region
  $region22: #{tpu_custom_call.1} parent=0 // pred_check
    _
  $region23: #{tpu_custom_call.1} parent=0 // pred_check_branch
    %98 = sbr.rel (0) target = $region25
  $region24: #{tpu_custom_call.1} parent=0 // pred_region
    _
  $region25: #{tpu_custom_call.1} parent=0 // pred_fallthru
    _
  // Predicated region
  $region26: #{tpu_custom_call.1} parent=0 // pred_check
    _
  $region27: #{tpu_custom_call.1} parent=0 // pred_check_branch
    %100 = sbr.rel (0) target = $region29
  $region28: #{tpu_custom_call.1} parent=0 // pred_region
    _
  $region29: #{tpu_custom_call.1} parent=0 // pred_fallthru
    _

</llo_original>
